<compile_context>
chip_gen: v5e
topology: v5e:2x2
jax: 0.10.0
libtpu: 0.0.40
codegen_flags: <defaults>
</compile_context>

<pallas_src>
import functools

import jax
import jax.numpy as jnp
from jax.experimental import pallas as pl
from jax.experimental.pallas import tpu as pltpu


# ---------------------------------------------------------------------------
# Kernels
# ---------------------------------------------------------------------------


def _resident_gather_kernel(idx_ref, u_tab_ref, i_tab_ref, out_ref):
    """Gather TB batch rows per grid step from VMEM-resident tables.

    idx_ref   : (4, Bp) int32 scalar-prefetch ref (SMEM).
    u_tab_ref : (n_users, D) user table, resident in VMEM (fetched once).
    i_tab_ref : (n_items, D) item table, resident in VMEM (fetched once).
    out_ref   : (TB, 4*D) packed lane-dense output tile.
    """
    TB = out_ref.shape[0]
    b0 = pl.program_id(0) * TB

    def gather(tab_ref, which):
        # TB dynamic (1, D) row reads -> one (TB, D) block.
        return jnp.concatenate(
            [tab_ref[pl.ds(idx_ref[which, b0 + k], 1), :] for k in range(TB)],
            axis=0,
        )

    # Single full-tile (TB, 4*D) unmasked store.
    out_ref[...] = jnp.concatenate(
        [
            gather(u_tab_ref, 0),
            gather(i_tab_ref, 1),
            gather(i_tab_ref, 2),
            gather(i_tab_ref, 3),
        ],
        axis=1,
    )


def _dma_gather_kernel(idx_ref, u_hbm_ref, i_hbm_ref, out_ref, rows_vmem, sems):
    """Gather TB batch rows per grid step via manual HBM row DMAs.

    Tables stay in HBM (memory_space=pl.ANY); 4*TB row DMAs are issued into a
    (4, TB, D) VMEM scratch (issue-all-then-wait-all) and assembled into one
    (TB, 4*D) output tile.
    """
    TB = out_ref.shape[0]
    b0 = pl.program_id(0) * TB
    tabs = (u_hbm_ref, i_hbm_ref, i_hbm_ref, i_hbm_ref)

    copies = []
    for j in range(4):
        for k in range(TB):
            rid = idx_ref[j, b0 + k]
            cp = pltpu.make_async_copy(
                tabs[j].at[rid], rows_vmem.at[j, k], sems.at[j, k]
            )
            cp.start()
            copies.append(cp)
    for cp in copies:
        cp.wait()

    out_ref[...] = jnp.concatenate(
        [rows_vmem[0], rows_vmem[1], rows_vmem[2], rows_vmem[3]], axis=1
    )


# ---------------------------------------------------------------------------
# Wrapper
# ---------------------------------------------------------------------------


def _vmem_budget_bytes():
    """Generation-aware VMEM budget (~75% of physical VMEM per TensorCore)."""
    try:
        cap = pltpu.get_tpu_info().vmem_capacity_bytes
    except Exception:
        cap = 64 * 1024 * 1024  # conservative default: v7x physical VMEM
    return int(cap) * 3 // 4


@functools.partial(jax.jit, static_argnames=("block_b", "force_path"))
def setrank_forward(
    user_emb,
    item_emb,
    users,
    pos_items,
    pot_items,
    neg_items,
    block_b=8,
    force_path=None,
):
    """Pallas equivalent of SetRank.forward (four embedding-row gathers)."""
    B = users.shape[0]
    n_users, D = user_emb.shape
    n_items = item_emb.shape[0]
    out_dtype = user_emb.dtype
    itemsize = jnp.dtype(out_dtype).itemsize

    TB = int(block_b)
    Bp = ((B + TB - 1) // TB) * TB  # pad batch to a multiple of TB
    num_tiles = Bp // TB

    # Clamp so out-of-range ids never turn into unchecked OOB accesses, then
    # pack the four index vectors into the (4, Bp) scalar-prefetch matrix.
    idx = jnp.stack(
        [
            jnp.clip(users.astype(jnp.int32), 0, n_users - 1),
            jnp.clip(pos_items.astype(jnp.int32), 0, n_items - 1),
            jnp.clip(pot_items.astype(jnp.int32), 0, n_items - 1),
            jnp.clip(neg_items.astype(jnp.int32), 0, n_items - 1),
        ],
        axis=0,
    )
    if Bp != B:
        # Pad with row id 0 (always valid); padded rows are sliced off below.
        idx = jnp.pad(idx, ((0, 0), (0, Bp - B)))

    # --- choose path (static, shape-based) ---------------------------------
    table_bytes = (n_users + n_items) * D * itemsize
    out_tile_bytes = TB * 4 * D * itemsize
    # Tables are double-buffered by the BlockSpec pipeline -> budget 2x.
    resident_need = 2 * table_bytes + 2 * out_tile_bytes + (1 << 20)
    budget = _vmem_budget_bytes()

    use_resident = resident_need <= budget
    if force_path == "resident":
        use_resident = True
    elif force_path == "dma":
        use_resident = False

    if use_resident:
        grid_spec = pltpu.PrefetchScalarGridSpec(
            num_scalar_prefetch=1,
            grid=(num_tiles,),
            in_specs=[
                # Full-array blocks + constant index_map => fetched once and
                # resident in VMEM for the whole grid.
                pl.BlockSpec((n_users, D), lambda i, idx: (0, 0)),
                pl.BlockSpec((n_items, D), lambda i, idx: (0, 0)),
            ],
            out_specs=pl.BlockSpec((TB, 4 * D), lambda i, idx: (i, 0)),
        )
        packed = pl.pallas_call(
            _resident_gather_kernel,
            out_shape=jax.ShapeDtypeStruct((Bp, 4 * D), out_dtype),
            grid_spec=grid_spec,
            compiler_params=pltpu.CompilerParams(
                dimension_semantics=("parallel",),
                vmem_limit_bytes=max(32 * 1024 * 1024, resident_need),
            ),
        )(idx, user_emb, item_emb)
    else:
        grid_spec = pltpu.PrefetchScalarGridSpec(
            num_scalar_prefetch=1,
            grid=(num_tiles,),
            in_specs=[
                pl.BlockSpec(memory_space=pl.ANY),  # user table stays in HBM
                pl.BlockSpec(memory_space=pl.ANY),  # item table stays in HBM
            ],
            out_specs=pl.BlockSpec((TB, 4 * D), lambda i, idx: (i, 0)),
            scratch_shapes=[
                pltpu.VMEM((4, TB, D), out_dtype),
                pltpu.SemaphoreType.DMA((4, TB)),
            ],
        )
        packed = pl.pallas_call(
            _dma_gather_kernel,
            out_shape=jax.ShapeDtypeStruct((Bp, 4 * D), out_dtype),
            grid_spec=grid_spec,
            compiler_params=pltpu.CompilerParams(
                dimension_semantics=("parallel",),
            ),
        )(idx, user_emb, item_emb)

    packed = packed[:B]
    # TODO(synk): downstream consumers (rating / BPR loss) could consume the
    # packed (B, 4*D) slab directly and skip these four XLA slice copies.
    return (
        packed[:, 0 * D:1 * D],
        packed[:, 1 * D:2 * D],
        packed[:, 2 * D:3 * D],
        packed[:, 3 * D:4 * D],
    )


# ---------------------------------------------------------------------------
# Model wrapper (matches the PyTorch module's forward semantics)
# ---------------------------------------------------------------------------


def xavier_uniform(key, shape, dtype=jnp.float32):
    fan_in, fan_out = shape
    limit = (6.0 / (fan_in + fan_out)) ** 0.5
    return jax.random.uniform(key, shape, dtype=dtype, minval=-limit, maxval=limit)


class SetRankPallas:
    def __init__(self, user_num, item_num, embed_size, key):
        ku, ki = jax.random.split(key)
        self.user_emb = xavier_uniform(ku, (user_num, embed_size))
        self.item_emb = xavier_uniform(ki, (item_num, embed_size))

    def forward(self, users, pos_items, pot_items, neg_items, drop_flag=False):
        return setrank_forward(
            self.user_emb, self.item_emb, users, pos_items, pot_items, neg_items
        )


if __name__ == "__main__":
    key = jax.random.PRNGKey(0)
    k_model, k_u, k_p, k_t, k_n = jax.random.split(key, 5)

    USER_NUM, ITEM_NUM, EMBED_SIZE, BATCH = 64, 96, 32, 13  # B % TB != 0 (tail pad)

    model = SetRankPallas(USER_NUM, ITEM_NUM, EMBED_SIZE, k_model)

    users = jax.random.randint(k_u, (BATCH,), 0, USER_NUM, dtype=jnp.int32)
    pos_items = jax.random.randint(k_p, (BATCH,), 0, ITEM_NUM, dtype=jnp.int32)
    pot_items = jax.random.randint(k_t, (BATCH,), 0, ITEM_NUM, dtype=jnp.int32)
    neg_items = jax.random.randint(k_n, (BATCH,), 0, ITEM_NUM, dtype=jnp.int32)

    # Default dispatch: tables are tiny -> VMEM-resident fast path.
    outs = model.forward(users, pos_items, pot_items, neg_items)
    u_e, pos_e, pot_e, neg_e = jax.block_until_ready(outs)

    ref_u = model.user_emb[users, :]
    ref_pos = model.item_emb[pos_items, :]
    ref_pot = model.item_emb[pot_items, :]
    ref_neg = model.item_emb[neg_items, :]

    assert jnp.allclose(u_e, ref_u)
    assert jnp.allclose(pos_e, ref_pos)
    assert jnp.allclose(pot_e, ref_pot)
    assert jnp.allclose(neg_e, ref_neg)

    # Exercise the large-table fallback (manual HBM row-DMA gather) as well.
    outs_dma = setrank_forward(
        model.user_emb,
        model.item_emb,
        users,
        pos_items,
        pot_items,
        neg_items,
        force_path="dma",
    )
    u_d, pos_d, pot_d, neg_d = jax.block_until_ready(outs_dma)
    assert jnp.allclose(u_d, ref_u)
    assert jnp.allclose(pos_d, ref_pos)
    assert jnp.allclose(pot_d, ref_pot)
    assert jnp.allclose(neg_d, ref_neg)

    print("KERNEL_OK")
</pallas_src>

<mosaic_0001>
module attributes {stable_mosaic.version = 11 : i64} {
  func.func @_resident_gather_kernel(%arg0: i32, %arg1: memref<4x16xi32, #tpu.memory_space<smem>>, %arg2: memref<64x32xf32, #tpu.memory_space<vmem>>, %arg3: memref<96x32xf32, #tpu.memory_space<vmem>>, %arg4: memref<8x128xf32, #tpu.memory_space<vmem>>) attributes {dimension_semantics = [#tpu.dimension_semantics<parallel>], iteration_bounds = array<i64: 2>, scalar_prefetch = 1 : i64, scratch_operands = 0 : i64, tpu.core_type = #tpu.core_type<tc>, window_params = [{pipeline_mode = #tpu.pipeline_mode<synchronous>, transform_indices = @transform_0, window_bounds = array<i64: 64, 32>}, {pipeline_mode = #tpu.pipeline_mode<synchronous>, transform_indices = @transform_1, window_bounds = array<i64: 96, 32>}, {transform_indices = @transform_2, window_bounds = array<i64: 8, 128>}]} {
    %c8_i32 = arith.constant 8 : i32
    %0 = arith.muli %arg0, %c8_i32 : i32
    %c0_i32 = arith.constant 0 : i32
    %1 = arith.addi %0, %c0_i32 : i32
    %c0 = arith.constant 0 : index
    %2 = arith.index_cast %1 : i32 to index
    %3 = memref.load %arg1[%c0, %2] : memref<4x16xi32, #tpu.memory_space<smem>>
    %4 = arith.index_cast %3 : i32 to index
    %c0_0 = arith.constant 0 : index
    %5 = vector.load %arg2[%4, %c0_0] : memref<64x32xf32, #tpu.memory_space<vmem>>, vector<1x32xf32>
    %c1_i32 = arith.constant 1 : i32
    %6 = arith.addi %0, %c1_i32 : i32
    %c0_1 = arith.constant 0 : index
    %7 = arith.index_cast %6 : i32 to index
    %8 = memref.load %arg1[%c0_1, %7] : memref<4x16xi32, #tpu.memory_space<smem>>
    %9 = arith.index_cast %8 : i32 to index
    %c0_2 = arith.constant 0 : index
    %10 = vector.load %arg2[%9, %c0_2] : memref<64x32xf32, #tpu.memory_space<vmem>>, vector<1x32xf32>
    %c2_i32 = arith.constant 2 : i32
    %11 = arith.addi %0, %c2_i32 : i32
    %c0_3 = arith.constant 0 : index
    %12 = arith.index_cast %11 : i32 to index
    %13 = memref.load %arg1[%c0_3, %12] : memref<4x16xi32, #tpu.memory_space<smem>>
    %14 = arith.index_cast %13 : i32 to index
    %c0_4 = arith.constant 0 : index
    %15 = vector.load %arg2[%14, %c0_4] : memref<64x32xf32, #tpu.memory_space<vmem>>, vector<1x32xf32>
    %c3_i32 = arith.constant 3 : i32
    %16 = arith.addi %0, %c3_i32 : i32
    %c0_5 = arith.constant 0 : index
    %17 = arith.index_cast %16 : i32 to index
    %18 = memref.load %arg1[%c0_5, %17] : memref<4x16xi32, #tpu.memory_space<smem>>
    %19 = arith.index_cast %18 : i32 to index
    %c0_6 = arith.constant 0 : index
    %20 = vector.load %arg2[%19, %c0_6] : memref<64x32xf32, #tpu.memory_space<vmem>>, vector<1x32xf32>
    %c4_i32 = arith.constant 4 : i32
    %21 = arith.addi %0, %c4_i32 : i32
    %c0_7 = arith.constant 0 : index
    %22 = arith.index_cast %21 : i32 to index
    %23 = memref.load %arg1[%c0_7, %22] : memref<4x16xi32, #tpu.memory_space<smem>>
    %24 = arith.index_cast %23 : i32 to index
    %c0_8 = arith.constant 0 : index
    %25 = vector.load %arg2[%24, %c0_8] : memref<64x32xf32, #tpu.memory_space<vmem>>, vector<1x32xf32>
    %c5_i32 = arith.constant 5 : i32
    %26 = arith.addi %0, %c5_i32 : i32
    %c0_9 = arith.constant 0 : index
    %27 = arith.index_cast %26 : i32 to index
    %28 = memref.load %arg1[%c0_9, %27] : memref<4x16xi32, #tpu.memory_space<smem>>
    %29 = arith.index_cast %28 : i32 to index
    %c0_10 = arith.constant 0 : index
    %30 = vector.load %arg2[%29, %c0_10] : memref<64x32xf32, #tpu.memory_space<vmem>>, vector<1x32xf32>
    %c6_i32 = arith.constant 6 : i32
    %31 = arith.addi %0, %c6_i32 : i32
    %c0_11 = arith.constant 0 : index
    %32 = arith.index_cast %31 : i32 to index
    %33 = memref.load %arg1[%c0_11, %32] : memref<4x16xi32, #tpu.memory_space<smem>>
    %34 = arith.index_cast %33 : i32 to index
    %c0_12 = arith.constant 0 : index
    %35 = vector.load %arg2[%34, %c0_12] : memref<64x32xf32, #tpu.memory_space<vmem>>, vector<1x32xf32>
    %c7_i32 = arith.constant 7 : i32
    %36 = arith.addi %0, %c7_i32 : i32
    %c0_13 = arith.constant 0 : index
    %37 = arith.index_cast %36 : i32 to index
    %38 = memref.load %arg1[%c0_13, %37] : memref<4x16xi32, #tpu.memory_space<smem>>
    %39 = arith.index_cast %38 : i32 to index
    %c0_14 = arith.constant 0 : index
    %40 = vector.load %arg2[%39, %c0_14] : memref<64x32xf32, #tpu.memory_space<vmem>>, vector<1x32xf32>
    %41 = tpu.concatenate %5, %10, %15, %20, %25, %30, %35, %40 in 0 : vector<1x32xf32>, vector<1x32xf32>, vector<1x32xf32>, vector<1x32xf32>, vector<1x32xf32>, vector<1x32xf32>, vector<1x32xf32>, vector<1x32xf32> -> vector<8x32xf32>
    %c0_i32_15 = arith.constant 0 : i32
    %42 = arith.addi %0, %c0_i32_15 : i32
    %c1 = arith.constant 1 : index
    %43 = arith.index_cast %42 : i32 to index
    %44 = memref.load %arg1[%c1, %43] : memref<4x16xi32, #tpu.memory_space<smem>>
    %45 = arith.index_cast %44 : i32 to index
    %c0_16 = arith.constant 0 : index
    %46 = vector.load %arg3[%45, %c0_16] : memref<96x32xf32, #tpu.memory_space<vmem>>, vector<1x32xf32>
    %c1_i32_17 = arith.constant 1 : i32
    %47 = arith.addi %0, %c1_i32_17 : i32
    %c1_18 = arith.constant 1 : index
    %48 = arith.index_cast %47 : i32 to index
    %49 = memref.load %arg1[%c1_18, %48] : memref<4x16xi32, #tpu.memory_space<smem>>
    %50 = arith.index_cast %49 : i32 to index
    %c0_19 = arith.constant 0 : index
    %51 = vector.load %arg3[%50, %c0_19] : memref<96x32xf32, #tpu.memory_space<vmem>>, vector<1x32xf32>
    %c2_i32_20 = arith.constant 2 : i32
    %52 = arith.addi %0, %c2_i32_20 : i32
    %c1_21 = arith.constant 1 : index
    %53 = arith.index_cast %52 : i32 to index
    %54 = memref.load %arg1[%c1_21, %53] : memref<4x16xi32, #tpu.memory_space<smem>>
    %55 = arith.index_cast %54 : i32 to index
    %c0_22 = arith.constant 0 : index
    %56 = vector.load %arg3[%55, %c0_22] : memref<96x32xf32, #tpu.memory_space<vmem>>, vector<1x32xf32>
    %c3_i32_23 = arith.constant 3 : i32
    %57 = arith.addi %0, %c3_i32_23 : i32
    %c1_24 = arith.constant 1 : index
    %58 = arith.index_cast %57 : i32 to index
    %59 = memref.load %arg1[%c1_24, %58] : memref<4x16xi32, #tpu.memory_space<smem>>
    %60 = arith.index_cast %59 : i32 to index
    %c0_25 = arith.constant 0 : index
    %61 = vector.load %arg3[%60, %c0_25] : memref<96x32xf32, #tpu.memory_space<vmem>>, vector<1x32xf32>
    %c4_i32_26 = arith.constant 4 : i32
    %62 = arith.addi %0, %c4_i32_26 : i32
    %c1_27 = arith.constant 1 : index
    %63 = arith.index_cast %62 : i32 to index
    %64 = memref.load %arg1[%c1_27, %63] : memref<4x16xi32, #tpu.memory_space<smem>>
    %65 = arith.index_cast %64 : i32 to index
    %c0_28 = arith.constant 0 : index
    %66 = vector.load %arg3[%65, %c0_28] : memref<96x32xf32, #tpu.memory_space<vmem>>, vector<1x32xf32>
    %c5_i32_29 = arith.constant 5 : i32
    %67 = arith.addi %0, %c5_i32_29 : i32
    %c1_30 = arith.constant 1 : index
    %68 = arith.index_cast %67 : i32 to index
    %69 = memref.load %arg1[%c1_30, %68] : memref<4x16xi32, #tpu.memory_space<smem>>
    %70 = arith.index_cast %69 : i32 to index
    %c0_31 = arith.constant 0 : index
    %71 = vector.load %arg3[%70, %c0_31] : memref<96x32xf32, #tpu.memory_space<vmem>>, vector<1x32xf32>
    %c6_i32_32 = arith.constant 6 : i32
    %72 = arith.addi %0, %c6_i32_32 : i32
    %c1_33 = arith.constant 1 : index
    %73 = arith.index_cast %72 : i32 to index
    %74 = memref.load %arg1[%c1_33, %73] : memref<4x16xi32, #tpu.memory_space<smem>>
    %75 = arith.index_cast %74 : i32 to index
    %c0_34 = arith.constant 0 : index
    %76 = vector.load %arg3[%75, %c0_34] : memref<96x32xf32, #tpu.memory_space<vmem>>, vector<1x32xf32>
    %c7_i32_35 = arith.constant 7 : i32
    %77 = arith.addi %0, %c7_i32_35 : i32
    %c1_36 = arith.constant 1 : index
    %78 = arith.index_cast %77 : i32 to index
    %79 = memref.load %arg1[%c1_36, %78] : memref<4x16xi32, #tpu.memory_space<smem>>
    %80 = arith.index_cast %79 : i32 to index
    %c0_37 = arith.constant 0 : index
    %81 = vector.load %arg3[%80, %c0_37] : memref<96x32xf32, #tpu.memory_space<vmem>>, vector<1x32xf32>
    %82 = tpu.concatenate %46, %51, %56, %61, %66, %71, %76, %81 in 0 : vector<1x32xf32>, vector<1x32xf32>, vector<1x32xf32>, vector<1x32xf32>, vector<1x32xf32>, vector<1x32xf32>, vector<1x32xf32>, vector<1x32xf32> -> vector<8x32xf32>
    %c0_i32_38 = arith.constant 0 : i32
    %83 = arith.addi %0, %c0_i32_38 : i32
    %c2 = arith.constant 2 : index
    %84 = arith.index_cast %83 : i32 to index
    %85 = memref.load %arg1[%c2, %84] : memref<4x16xi32, #tpu.memory_space<smem>>
    %86 = arith.index_cast %85 : i32 to index
    %c0_39 = arith.constant 0 : index
    %87 = vector.load %arg3[%86, %c0_39] : memref<96x32xf32, #tpu.memory_space<vmem>>, vector<1x32xf32>
    %c1_i32_40 = arith.constant 1 : i32
    %88 = arith.addi %0, %c1_i32_40 : i32
    %c2_41 = arith.constant 2 : index
    %89 = arith.index_cast %88 : i32 to index
    %90 = memref.load %arg1[%c2_41, %89] : memref<4x16xi32, #tpu.memory_space<smem>>
    %91 = arith.index_cast %90 : i32 to index
    %c0_42 = arith.constant 0 : index
    %92 = vector.load %arg3[%91, %c0_42] : memref<96x32xf32, #tpu.memory_space<vmem>>, vector<1x32xf32>
    %c2_i32_43 = arith.constant 2 : i32
    %93 = arith.addi %0, %c2_i32_43 : i32
    %c2_44 = arith.constant 2 : index
    %94 = arith.index_cast %93 : i32 to index
    %95 = memref.load %arg1[%c2_44, %94] : memref<4x16xi32, #tpu.memory_space<smem>>
    %96 = arith.index_cast %95 : i32 to index
    %c0_45 = arith.constant 0 : index
    %97 = vector.load %arg3[%96, %c0_45] : memref<96x32xf32, #tpu.memory_space<vmem>>, vector<1x32xf32>
    %c3_i32_46 = arith.constant 3 : i32
    %98 = arith.addi %0, %c3_i32_46 : i32
    %c2_47 = arith.constant 2 : index
    %99 = arith.index_cast %98 : i32 to index
    %100 = memref.load %arg1[%c2_47, %99] : memref<4x16xi32, #tpu.memory_space<smem>>
    %101 = arith.index_cast %100 : i32 to index
    %c0_48 = arith.constant 0 : index
    %102 = vector.load %arg3[%101, %c0_48] : memref<96x32xf32, #tpu.memory_space<vmem>>, vector<1x32xf32>
    %c4_i32_49 = arith.constant 4 : i32
    %103 = arith.addi %0, %c4_i32_49 : i32
    %c2_50 = arith.constant 2 : index
    %104 = arith.index_cast %103 : i32 to index
    %105 = memref.load %arg1[%c2_50, %104] : memref<4x16xi32, #tpu.memory_space<smem>>
    %106 = arith.index_cast %105 : i32 to index
    %c0_51 = arith.constant 0 : index
    %107 = vector.load %arg3[%106, %c0_51] : memref<96x32xf32, #tpu.memory_space<vmem>>, vector<1x32xf32>
    %c5_i32_52 = arith.constant 5 : i32
    %108 = arith.addi %0, %c5_i32_52 : i32
    %c2_53 = arith.constant 2 : index
    %109 = arith.index_cast %108 : i32 to index
    %110 = memref.load %arg1[%c2_53, %109] : memref<4x16xi32, #tpu.memory_space<smem>>
    %111 = arith.index_cast %110 : i32 to index
    %c0_54 = arith.constant 0 : index
    %112 = vector.load %arg3[%111, %c0_54] : memref<96x32xf32, #tpu.memory_space<vmem>>, vector<1x32xf32>
    %c6_i32_55 = arith.constant 6 : i32
    %113 = arith.addi %0, %c6_i32_55 : i32
    %c2_56 = arith.constant 2 : index
    %114 = arith.index_cast %113 : i32 to index
    %115 = memref.load %arg1[%c2_56, %114] : memref<4x16xi32, #tpu.memory_space<smem>>
    %116 = arith.index_cast %115 : i32 to index
    %c0_57 = arith.constant 0 : index
    %117 = vector.load %arg3[%116, %c0_57] : memref<96x32xf32, #tpu.memory_space<vmem>>, vector<1x32xf32>
    %c7_i32_58 = arith.constant 7 : i32
    %118 = arith.addi %0, %c7_i32_58 : i32
    %c2_59 = arith.constant 2 : index
    %119 = arith.index_cast %118 : i32 to index
    %120 = memref.load %arg1[%c2_59, %119] : memref<4x16xi32, #tpu.memory_space<smem>>
    %121 = arith.index_cast %120 : i32 to index
    %c0_60 = arith.constant 0 : index
    %122 = vector.load %arg3[%121, %c0_60] : memref<96x32xf32, #tpu.memory_space<vmem>>, vector<1x32xf32>
    %123 = tpu.concatenate %87, %92, %97, %102, %107, %112, %117, %122 in 0 : vector<1x32xf32>, vector<1x32xf32>, vector<1x32xf32>, vector<1x32xf32>, vector<1x32xf32>, vector<1x32xf32>, vector<1x32xf32>, vector<1x32xf32> -> vector<8x32xf32>
    %c0_i32_61 = arith.constant 0 : i32
    %124 = arith.addi %0, %c0_i32_61 : i32
    %c3 = arith.constant 3 : index
    %125 = arith.index_cast %124 : i32 to index
    %126 = memref.load %arg1[%c3, %125] : memref<4x16xi32, #tpu.memory_space<smem>>
    %127 = arith.index_cast %126 : i32 to index
    %c0_62 = arith.constant 0 : index
    %128 = vector.load %arg3[%127, %c0_62] : memref<96x32xf32, #tpu.memory_space<vmem>>, vector<1x32xf32>
    %c1_i32_63 = arith.constant 1 : i32
    %129 = arith.addi %0, %c1_i32_63 : i32
    %c3_64 = arith.constant 3 : index
    %130 = arith.index_cast %129 : i32 to index
    %131 = memref.load %arg1[%c3_64, %130] : memref<4x16xi32, #tpu.memory_space<smem>>
    %132 = arith.index_cast %131 : i32 to index
    %c0_65 = arith.constant 0 : index
    %133 = vector.load %arg3[%132, %c0_65] : memref<96x32xf32, #tpu.memory_space<vmem>>, vector<1x32xf32>
    %c2_i32_66 = arith.constant 2 : i32
    %134 = arith.addi %0, %c2_i32_66 : i32
    %c3_67 = arith.constant 3 : index
    %135 = arith.index_cast %134 : i32 to index
    %136 = memref.load %arg1[%c3_67, %135] : memref<4x16xi32, #tpu.memory_space<smem>>
    %137 = arith.index_cast %136 : i32 to index
    %c0_68 = arith.constant 0 : index
    %138 = vector.load %arg3[%137, %c0_68] : memref<96x32xf32, #tpu.memory_space<vmem>>, vector<1x32xf32>
    %c3_i32_69 = arith.constant 3 : i32
    %139 = arith.addi %0, %c3_i32_69 : i32
    %c3_70 = arith.constant 3 : index
    %140 = arith.index_cast %139 : i32 to index
    %141 = memref.load %arg1[%c3_70, %140] : memref<4x16xi32, #tpu.memory_space<smem>>
    %142 = arith.index_cast %141 : i32 to index
    %c0_71 = arith.constant 0 : index
    %143 = vector.load %arg3[%142, %c0_71] : memref<96x32xf32, #tpu.memory_space<vmem>>, vector<1x32xf32>
    %c4_i32_72 = arith.constant 4 : i32
    %144 = arith.addi %0, %c4_i32_72 : i32
    %c3_73 = arith.constant 3 : index
    %145 = arith.index_cast %144 : i32 to index
    %146 = memref.load %arg1[%c3_73, %145] : memref<4x16xi32, #tpu.memory_space<smem>>
    %147 = arith.index_cast %146 : i32 to index
    %c0_74 = arith.constant 0 : index
    %148 = vector.load %arg3[%147, %c0_74] : memref<96x32xf32, #tpu.memory_space<vmem>>, vector<1x32xf32>
    %c5_i32_75 = arith.constant 5 : i32
    %149 = arith.addi %0, %c5_i32_75 : i32
    %c3_76 = arith.constant 3 : index
    %150 = arith.index_cast %149 : i32 to index
    %151 = memref.load %arg1[%c3_76, %150] : memref<4x16xi32, #tpu.memory_space<smem>>
    %152 = arith.index_cast %151 : i32 to index
    %c0_77 = arith.constant 0 : index
    %153 = vector.load %arg3[%152, %c0_77] : memref<96x32xf32, #tpu.memory_space<vmem>>, vector<1x32xf32>
    %c6_i32_78 = arith.constant 6 : i32
    %154 = arith.addi %0, %c6_i32_78 : i32
    %c3_79 = arith.constant 3 : index
    %155 = arith.index_cast %154 : i32 to index
    %156 = memref.load %arg1[%c3_79, %155] : memref<4x16xi32, #tpu.memory_space<smem>>
    %157 = arith.index_cast %156 : i32 to index
    %c0_80 = arith.constant 0 : index
    %158 = vector.load %arg3[%157, %c0_80] : memref<96x32xf32, #tpu.memory_space<vmem>>, vector<1x32xf32>
    %c7_i32_81 = arith.constant 7 : i32
    %159 = arith.addi %0, %c7_i32_81 : i32
    %c3_82 = arith.constant 3 : index
    %160 = arith.index_cast %159 : i32 to index
    %161 = memref.load %arg1[%c3_82, %160] : memref<4x16xi32, #tpu.memory_space<smem>>
    %162 = arith.index_cast %161 : i32 to index
    %c0_83 = arith.constant 0 : index
    %163 = vector.load %arg3[%162, %c0_83] : memref<96x32xf32, #tpu.memory_space<vmem>>, vector<1x32xf32>
    %164 = tpu.concatenate %128, %133, %138, %143, %148, %153, %158, %163 in 0 : vector<1x32xf32>, vector<1x32xf32>, vector<1x32xf32>, vector<1x32xf32>, vector<1x32xf32>, vector<1x32xf32>, vector<1x32xf32>, vector<1x32xf32> -> vector<8x32xf32>
    %165 = tpu.concatenate %41, %82, %123, %164 in 1 : vector<8x32xf32>, vector<8x32xf32>, vector<8x32xf32>, vector<8x32xf32> -> vector<8x128xf32>
    %c0_84 = arith.constant 0 : index
    %c0_85 = arith.constant 0 : index
    %166 = vector.load %arg4[%c0_84, %c0_85] : memref<8x128xf32, #tpu.memory_space<vmem>>, vector<8x128xf32>
    tpu.vector_store %arg4[%c0_84, %c0_85], %165 {strides = array<i32>} : memref<8x128xf32, #tpu.memory_space<vmem>>, vector<8x128xf32>,
    return
  }
  func.func @transform_0(%arg0: i32, %arg1: memref<4x16xi32, #tpu.memory_space<smem>>) -> (i32, i32) {
    %c0_i32 = arith.constant 0 : i32
    %c0_i32_0 = arith.constant 0 : i32
    %c0_i32_1 = arith.constant 0 : i32
    return %c0_i32, %c0_i32_0 : i32, i32
  }
  func.func @transform_1(%arg0: i32, %arg1: memref<4x16xi32, #tpu.memory_space<smem>>) -> (i32, i32) {
    %c0_i32 = arith.constant 0 : i32
    %c0_i32_0 = arith.constant 0 : i32
    %c0_i32_1 = arith.constant 0 : i32
    return %c0_i32, %c0_i32_0 : i32, i32
  }
  func.func @transform_2(%arg0: i32, %arg1: memref<4x16xi32, #tpu.memory_space<smem>>) -> (i32, i32) {
    %c0_i32 = arith.constant 0 : i32
    %c0_i32_0 = arith.constant 0 : i32
    return %arg0, %c0_i32 : i32, i32
  }
}

</mosaic_0001>

<llo_original>
// kernel: setrank_forward.1
$region0: #{setrank_forward.1}
  #allocation0 [shape = 'u32[]', space=smem, size = 0x4, offset = 0x4, fixed_abs, tag = 'smem constant byte address 0x4 - core index']
  #allocation1 [shape = 'u32[72,128]{1,0:T(1,128)}', space=vmem, size = 0x9000, scoped, tag = 'internal scratch']
  #allocation2 [shape = 's32[1]{0}', space=sflag, size = 0x4, scoped, tag = 'scoped memory for setrank_forward.1']
  #allocation3 [shape = 'u8[2048]{0}', space=smem, size = 0x800, scoped, tag = 'prefetched SMEM operand 0']
  %s0 = inlined_call_operand.vmem [shape: s32[4,16], index: 0, kind: input, shape index: {}]
  %s1 = inlined_call_operand.vmem [shape: f32[64,32], index: 1, kind: input, shape index: {}]
  %s2 = inlined_call_operand.vmem [shape: f32[96,32], index: 2, kind: input, shape index: {}]
  %s3 = inlined_call_operand.vmem [shape: f32[16,128], index: 3, kind: output, shape index: {}]
  %s4 = sld [smem:[#allocation0]]
  $region41: #{setrank_forward.1} parent=0
    _
  %s6 = ssub.s32 1, %s4
  %s7 = scalar_select 0, %s6, %s4
  %s9 = sshll.u32 %s0, 4
  %s10 = int_to_ptr.vmem [resolvable:$true] %s9
  %12 = dma.vmem_to_smem %s10, 64, [#allocation3], [#allocation2]
  %14 = dma.done [#allocation2], 64
  %15 = sfence
  loop: start=0, step=1, limit=4
  $region2: #{setrank_forward.1} parent=0 // loop_pre_header
    _
  $region3: #{setrank_forward.1} parent=0 // loop_header
    %s17 = sphi 0, %s21
    %p18 = scmp.ge.s32.totalorder %s17, 4
    %s25 = sphi 0, %s25
    %s27 = sphi 0, %s25
    %s28 = sphi 0, %s27
    %s42 = sphi 0, %s28
    %s46 = sphi 0, %s46
    %s48 = sphi 0, %s46
    %s49 = sphi 0, %s48
    %s63 = sphi 0, %s49
    %s69 = sphi 0, %s71
    %s72 = sphi 0, %s69
    %s73 = sphi 0, %s72
    %s89 = sphi 0, %s73
  $region4: #{setrank_forward.1} parent=0 // loop_header_branch
    %20 = sbr.rel (%p18) target = $region8
  $region5: #{setrank_forward.1} parent=0 // loop_body
    %s22 = ssub.s32 %s17, 1
    %s23 = ssub.s32 %s17, 2
    %s24 = sadd.s32 %s17, 1
    %s26 = sadd.s32 %s25, 1
    %p29 = scmp.eq.s32.totalorder %s17, 1
    %p30 = scmp.ne.s32.totalorder %s25, %s27
    %p31 = scmp.eq.s32.totalorder %s17, 0
    %p32 = por %p30, %p31
    %p33 = scmp.ne.s32.totalorder %s25, %s27
    %p34 = scmp.eq.s32.totalorder %s22, 1
    %p35 = por %p33, %p34
    %p36 = scmp.ne.s32.totalorder %s27, %s28
    %p37 = scmp.eq.s32.totalorder %s22, 0
    %p38 = por %p36, %p37
    %p39 = scmp.ne.s32.totalorder %s27, %s28
    %p40 = scmp.eq.s32.totalorder %s23, 1
    %p41 = por %p39, %p40
    %p43 = scmp.ne.s32.totalorder %s28, %s42
    %p44 = scmp.eq.s32.totalorder %s23, 0
    %p45 = por %p43, %p44
    %s47 = sadd.s32 %s46, 1
    %p50 = scmp.eq.s32.totalorder %s17, 1
    %p51 = scmp.ne.s32.totalorder %s46, %s48
    %p52 = scmp.eq.s32.totalorder %s17, 0
    %p53 = por %p51, %p52
    %p54 = scmp.ne.s32.totalorder %s46, %s48
    %p55 = scmp.eq.s32.totalorder %s22, 1
    %p56 = por %p54, %p55
    %p57 = scmp.ne.s32.totalorder %s48, %s49
    %p58 = scmp.eq.s32.totalorder %s22, 0
    %p59 = por %p57, %p58
    %p60 = scmp.ne.s32.totalorder %s48, %s49
    %p61 = scmp.eq.s32.totalorder %s23, 1
    %p62 = por %p60, %p61
    %p64 = scmp.ne.s32.totalorder %s49, %s63
    %p65 = scmp.eq.s32.totalorder %s23, 0
    %p66 = por %p64, %p65
    %s67 = ssub.s32 %s17, %s24
    %p68 = scmp.eq.s32.totalorder %s67, 0
    %s70 = sadd.s32 %s69, 1
    %s71 = scalar_select %p68, %s69, %s70
    %p74 = pneg %p68
    %p75 = scmp.eq.s32.totalorder %s17, 1
    %p76 = por %p74, %p75
    %p77 = scmp.ne.s32.totalorder %s69, %s72
    %p78 = scmp.eq.s32.totalorder %s17, 0
    %p79 = por %p77, %p78
    %p80 = scmp.ne.s32.totalorder %s69, %s72
    %p81 = scmp.eq.s32.totalorder %s22, 1
    %p82 = por %p80, %p81
    %p83 = scmp.ne.s32.totalorder %s72, %s73
    %p84 = scmp.eq.s32.totalorder %s22, 0
    %p85 = por %p83, %p84
    %p86 = scmp.ne.s32.totalorder %s72, %s73
    %p87 = scmp.eq.s32.totalorder %s23, 1
    %p88 = por %p86, %p87
    %p90 = scmp.ne.s32.totalorder %s73, %s89
    %p91 = scmp.eq.s32.totalorder %s23, 0
    %p92 = por %p90, %p91
    %p93 = scmp.le.s32.totalorder 1, %s17
    %p94 = scmp.lt.s32.totalorder %s17, 3
    %p95 = pnand %p93, %p94
    %p96 = pneg %p95
    // Predicated region
    $region9: #{setrank_forward.1} parent=5 // pred_check
      _
    $region10: #{setrank_forward.1} parent=5 // pred_check_branch
      %98 = sbr.rel (%p95) target = $region12
    $region11: #{setrank_forward.1} parent=5 // pred_region
      %s99 = ssub.s32 %s17, 1
      // Predicated region
      $region13: #{setrank_forward.1} parent=11 // pred_check
        %p100 = pneg %p38
      $region14: #{setrank_forward.1} parent=11 // pred_check_branch
        %102 = sbr.rel (%p100) target = $region16
      $region15: #{setrank_forward.1} parent=11 // pred_region
        _
      $region16: #{setrank_forward.1} parent=11 // pred_fallthru
        _
      // Predicated region
      $region17: #{setrank_forward.1} parent=11 // pred_check
        %p103 = pneg %p59
      $region18: #{setrank_forward.1} parent=11 // pred_check_branch
        %105 = sbr.rel (%p103) target = $region20
      $region19: #{setrank_forward.1} parent=11 // pred_region
        _
      $region20: #{setrank_forward.1} parent=11 // pred_fallthru
        _
    $region12: #{setrank_forward.1} parent=5 // pred_fallthru
      _
    %p106 = scmp.lt.s32.totalorder %s17, 2
    // Predicated region
    $region21: #{setrank_forward.1} parent=5 // pred_check
      %p107 = pneg %p106
    $region22: #{setrank_forward.1} parent=5 // pred_check_branch
      %109 = sbr.rel (%p107) target = $region24
    $region23: #{setrank_forward.1} parent=5 // pred_region
      _
    $region24: #{setrank_forward.1} parent=5 // pred_fallthru
      _
    %p110 = scmp.le.s32.totalorder 1, %s17
    %p111 = scmp.lt.s32.totalorder %s17, 3
    %p112 = pnand %p110, %p111
    %p113 = pneg %p112
    // Predicated region
    $region25: #{setrank_forward.1} parent=5 // pred_check
      _
    $region26: #{setrank_forward.1} parent=5 // pred_check_branch
      %115 = sbr.rel (%p112) target = $region28
    $region27: #{setrank_forward.1} parent=5 // pred_region
      %s116 = ssub.s32 %s17, 1
      %p117 = pneg %p38
      %p118 = pneg %p35
      %p119 = pneg %p59
      %p120 = pneg %p56
      %p121 = pneg %p85
      %p122 = pneg %p82
      %p123 = scmp.lt.s32.totalorder %s22, 1
      %s124 = scalar_select %p123, %s22, 1
      %s125 = smul.addr %s124, 8
      %s126 = scalar_lea.vmem %s3, %s125
      %p127 = scmp.lt.s32.totalorder %s22, 1
      %s128 = scalar_select %p127, %s22, 1
      %s129 = smul.addr %s128, 8
      %s130 = scalar_lea.vmem %s3, %s129
      %s131 = smul.u32 %s22, 8
      %s132 = sld [smem:[#allocation3 + %s131]]
      %s133 = scalar_lea.vmem %s1, %s132
      %v134 = vld [vmem:[%s133] sm:$0x1]
      %s135 = sadd.s32 %s131, 1
      %s136 = sld [smem:[#allocation3 + %s135]]
      %s137 = scalar_lea.vmem %s1, %s136
      %v138 = vld [vmem:[%s137] sm:$0x1]
      %s139 = sadd.s32 %s131, 2
      %s140 = sld [smem:[#allocation3 + %s139]]
      %s141 = scalar_lea.vmem %s1, %s140
      %v142 = vld [vmem:[%s141] sm:$0x1]
      %s143 = sadd.s32 %s131, 3
      %s144 = sld [smem:[#allocation3 + %s143]]
      %s145 = scalar_lea.vmem %s1, %s144
      %v146 = vld [vmem:[%s145] sm:$0x1]
      %s147 = sadd.s32 %s131, 4
      %s148 = sld [smem:[#allocation3 + %s147]]
      %s149 = scalar_lea.vmem %s1, %s148
      %v150 = vld [vmem:[%s149] sm:$0x1]
      %s151 = sadd.s32 %s131, 5
      %s152 = sld [smem:[#allocation3 + %s151]]
      %s153 = scalar_lea.vmem %s1, %s152
      %v154 = vld [vmem:[%s153] sm:$0x1]
      %s155 = sadd.s32 %s131, 6
      %s156 = sld [smem:[#allocation3 + %s155]]
      %s157 = scalar_lea.vmem %s1, %s156
      %v158 = vld [vmem:[%s157] sm:$0x1]
      %s159 = sadd.s32 %s131, 7
      %s160 = sld [smem:[#allocation3 + %s159]]
      %s161 = scalar_lea.vmem %s1, %s160
      %v162 = vld [vmem:[%s161] sm:$0x1]
      %v164 = vrot.slane %v138, 7
      %v167 = vrot.slane %v142, 6
      %v170 = vrot.slane %v146, 5
      %v173 = vrot.slane %v150, 4
      %v176 = vrot.slane %v154, 3
      %v179 = vrot.slane %v158, 2
      %v182 = vrot.slane %v162, 1
      %vm184 = vcmask 1040384
      %v185 = vsel %vm184, %v134, %v164
      %vm186 = vcmask 1041408
      %v187 = vsel %vm186, %v185, %v167
      %vm188 = vcmask 1042432
      %v189 = vsel %vm188, %v187, %v170
      %vm190 = vcmask 1043456
      %v191 = vsel %vm190, %v189, %v173
      %vm192 = vcmask 1044480
      %v193 = vsel %vm192, %v191, %v176
      %vm194 = vcmask 1045504
      %v195 = vsel %vm194, %v193, %v179
      %vm196 = vcmask 1046528
      %v197 = vsel %vm196, %v195, %v182
      %s198 = sshra.s32 %s131, 7
      %s199 = sand.u32 %s131, 127
      %s200 = sadd.s32 %s198, 1
      %s201 = smul.u32 %s200, 128
      %s202 = sshra.s32 %s131, 7
      %s203 = sand.u32 %s131, 127
      %s204 = sadd.s32 %s201, %s203
      %s205 = sld [smem:[#allocation3 + %s204]]
      %s206 = scalar_lea.vmem %s2, %s205
      %v207 = vld [vmem:[%s206] sm:$0x1]
      %s208 = sshra.s32 %s135, 7
      %s209 = sand.u32 %s135, 127
      %s210 = sadd.s32 %s208, 1
      %s211 = smul.u32 %s210, 128
      %s212 = sshra.s32 %s135, 7
      %s213 = sand.u32 %s135, 127
      %s214 = sadd.s32 %s211, %s213
      %s215 = sld [smem:[#allocation3 + %s214]]
      %s216 = scalar_lea.vmem %s2, %s215
      %v217 = vld [vmem:[%s216] sm:$0x1]
      %s218 = sshra.s32 %s139, 7
      %s219 = sand.u32 %s139, 127
      %s220 = sadd.s32 %s218, 1
      %s221 = smul.u32 %s220, 128
      %s222 = sshra.s32 %s139, 7
      %s223 = sand.u32 %s139, 127
      %s224 = sadd.s32 %s221, %s223
      %s225 = sld [smem:[#allocation3 + %s224]]
      %s226 = scalar_lea.vmem %s2, %s225
      %v227 = vld [vmem:[%s226] sm:$0x1]
      %s228 = sshra.s32 %s143, 7
      %s229 = sand.u32 %s143, 127
      %s230 = sadd.s32 %s228, 1
      %s231 = smul.u32 %s230, 128
      %s232 = sshra.s32 %s143, 7
      %s233 = sand.u32 %s143, 127
      %s234 = sadd.s32 %s231, %s233
      %s235 = sld [smem:[#allocation3 + %s234]]
      %s236 = scalar_lea.vmem %s2, %s235
      %v237 = vld [vmem:[%s236] sm:$0x1]
      %s238 = sshra.s32 %s147, 7
      %s239 = sand.u32 %s147, 127
      %s240 = sadd.s32 %s238, 1
      %s241 = smul.u32 %s240, 128
      %s242 = sshra.s32 %s147, 7
      %s243 = sand.u32 %s147, 127
      %s244 = sadd.s32 %s241, %s243
      %s245 = sld [smem:[#allocation3 + %s244]]
      %s246 = scalar_lea.vmem %s2, %s245
      %v247 = vld [vmem:[%s246] sm:$0x1]
      %s248 = sshra.s32 %s151, 7
      %s249 = sand.u32 %s151, 127
      %s250 = sadd.s32 %s248, 1
      %s251 = smul.u32 %s250, 128
      %s252 = sshra.s32 %s151, 7
      %s253 = sand.u32 %s151, 127
      %s254 = sadd.s32 %s251, %s253
      %s255 = sld [smem:[#allocation3 + %s254]]
      %s256 = scalar_lea.vmem %s2, %s255
      %v257 = vld [vmem:[%s256] sm:$0x1]
      %s258 = sshra.s32 %s155, 7
      %s259 = sand.u32 %s155, 127
      %s260 = sadd.s32 %s258, 1
      %s261 = smul.u32 %s260, 128
      %s262 = sshra.s32 %s155, 7
      %s263 = sand.u32 %s155, 127
      %s264 = sadd.s32 %s261, %s263
      %s265 = sld [smem:[#allocation3 + %s264]]
      %s266 = scalar_lea.vmem %s2, %s265
      %v267 = vld [vmem:[%s266] sm:$0x1]
      %s268 = sshra.s32 %s159, 7
      %s269 = sand.u32 %s159, 127
      %s270 = sadd.s32 %s268, 1
      %s271 = smul.u32 %s270, 128
      %s272 = sshra.s32 %s159, 7
      %s273 = sand.u32 %s159, 127
      %s274 = sadd.s32 %s271, %s273
      %s275 = sld [smem:[#allocation3 + %s274]]
      %s276 = scalar_lea.vmem %s2, %s275
      %v277 = vld [vmem:[%s276] sm:$0x1]
      %v279 = vrot.slane %v217, 7
      %v282 = vrot.slane %v227, 6
      %v285 = vrot.slane %v237, 5
      %v288 = vrot.slane %v247, 4
      %v291 = vrot.slane %v257, 3
      %v294 = vrot.slane %v267, 2
      %v297 = vrot.slane %v277, 1
      %v299 = vsel %vm184, %v207, %v279
      %v300 = vsel %vm186, %v299, %v282
      %v301 = vsel %vm188, %v300, %v285
      %v302 = vsel %vm190, %v301, %v288
      %v303 = vsel %vm192, %v302, %v291
      %v304 = vsel %vm194, %v303, %v294
      %v305 = vsel %vm196, %v304, %v297
      %s306 = sadd.s32 %s198, 2
      %s307 = smul.u32 %s306, 128
      %s308 = sadd.s32 %s307, %s203
      %s309 = sld [smem:[#allocation3 + %s308]]
      %s310 = scalar_lea.vmem %s2, %s309
      %v311 = vld [vmem:[%s310] sm:$0x1]
      %s312 = sadd.s32 %s208, 2
      %s313 = smul.u32 %s312, 128
      %s314 = sadd.s32 %s313, %s213
      %s315 = sld [smem:[#allocation3 + %s314]]
      %s316 = scalar_lea.vmem %s2, %s315
      %v317 = vld [vmem:[%s316] sm:$0x1]
      %s318 = sadd.s32 %s218, 2
      %s319 = smul.u32 %s318, 128
      %s320 = sadd.s32 %s319, %s223
      %s321 = sld [smem:[#allocation3 + %s320]]
      %s322 = scalar_lea.vmem %s2, %s321
      %v323 = vld [vmem:[%s322] sm:$0x1]
      %s324 = sadd.s32 %s228, 2
      %s325 = smul.u32 %s324, 128
      %s326 = sadd.s32 %s325, %s233
      %s327 = sld [smem:[#allocation3 + %s326]]
      %s328 = scalar_lea.vmem %s2, %s327
      %v329 = vld [vmem:[%s328] sm:$0x1]
      %s330 = sadd.s32 %s238, 2
      %s331 = smul.u32 %s330, 128
      %s332 = sadd.s32 %s331, %s243
      %s333 = sld [smem:[#allocation3 + %s332]]
      %s334 = scalar_lea.vmem %s2, %s333
      %v335 = vld [vmem:[%s334] sm:$0x1]
      %s336 = sadd.s32 %s248, 2
      %s337 = smul.u32 %s336, 128
      %s338 = sadd.s32 %s337, %s253
      %s339 = sld [smem:[#allocation3 + %s338]]
      %s340 = scalar_lea.vmem %s2, %s339
      %v341 = vld [vmem:[%s340] sm:$0x1]
      %s342 = sadd.s32 %s258, 2
      %s343 = smul.u32 %s342, 128
      %s344 = sadd.s32 %s343, %s263
      %s345 = sld [smem:[#allocation3 + %s344]]
      %s346 = scalar_lea.vmem %s2, %s345
      %v347 = vld [vmem:[%s346] sm:$0x1]
      %s348 = sadd.s32 %s268, 2
      %s349 = smul.u32 %s348, 128
      %s350 = sadd.s32 %s349, %s273
      %s351 = sld [smem:[#allocation3 + %s350]]
      %s352 = scalar_lea.vmem %s2, %s351
      %v353 = vld [vmem:[%s352] sm:$0x1]
      %v355 = vrot.slane %v317, 7
      %v358 = vrot.slane %v323, 6
      %v361 = vrot.slane %v329, 5
      %v364 = vrot.slane %v335, 4
      %v367 = vrot.slane %v341, 3
      %v370 = vrot.slane %v347, 2
      %v373 = vrot.slane %v353, 1
      %v375 = vsel %vm184, %v311, %v355
      %v376 = vsel %vm186, %v375, %v358
      %v377 = vsel %vm188, %v376, %v361
      %v378 = vsel %vm190, %v377, %v364
      %v379 = vsel %vm192, %v378, %v367
      %v380 = vsel %vm194, %v379, %v370
      %v381 = vsel %vm196, %v380, %v373
      %s382 = sadd.s32 %s198, 3
      %s383 = smul.u32 %s382, 128
      %s384 = sadd.s32 %s383, %s203
      %s385 = sld [smem:[#allocation3 + %s384]]
      %s386 = scalar_lea.vmem %s2, %s385
      %v387 = vld [vmem:[%s386] sm:$0x1]
      %s388 = sadd.s32 %s208, 3
      %s389 = smul.u32 %s388, 128
      %s390 = sadd.s32 %s389, %s213
      %s391 = sld [smem:[#allocation3 + %s390]]
      %s392 = scalar_lea.vmem %s2, %s391
      %v393 = vld [vmem:[%s392] sm:$0x1]
      %s394 = sadd.s32 %s218, 3
      %s395 = smul.u32 %s394, 128
      %s396 = sadd.s32 %s395, %s223
      %s397 = sld [smem:[#allocation3 + %s396]]
      %s398 = scalar_lea.vmem %s2, %s397
      %v399 = vld [vmem:[%s398] sm:$0x1]
      %s400 = sadd.s32 %s228, 3
      %s401 = smul.u32 %s400, 128
      %s402 = sadd.s32 %s401, %s233
      %s403 = sld [smem:[#allocation3 + %s402]]
      %s404 = scalar_lea.vmem %s2, %s403
      %v405 = vld [vmem:[%s404] sm:$0x1]
      %s406 = sadd.s32 %s238, 3
      %s407 = smul.u32 %s406, 128
      %s408 = sadd.s32 %s407, %s243
      %s409 = sld [smem:[#allocation3 + %s408]]
      %s410 = scalar_lea.vmem %s2, %s409
      %v411 = vld [vmem:[%s410] sm:$0x1]
      %s412 = sadd.s32 %s248, 3
      %s413 = smul.u32 %s412, 128
      %s414 = sadd.s32 %s413, %s253
      %s415 = sld [smem:[#allocation3 + %s414]]
      %s416 = scalar_lea.vmem %s2, %s415
      %v417 = vld [vmem:[%s416] sm:$0x1]
      %s418 = sadd.s32 %s258, 3
      %s419 = smul.u32 %s418, 128
      %s420 = sadd.s32 %s419, %s263
      %s421 = sld [smem:[#allocation3 + %s420]]
      %s422 = scalar_lea.vmem %s2, %s421
      %v423 = vld [vmem:[%s422] sm:$0x1]
      %s424 = sadd.s32 %s268, 3
      %s425 = smul.u32 %s424, 128
      %s426 = sadd.s32 %s425, %s273
      %s427 = sld [smem:[#allocation3 + %s426]]
      %s428 = scalar_lea.vmem %s2, %s427
      %v429 = vld [vmem:[%s428] sm:$0x1]
      %v431 = vrot.slane %v393, 7
      %v434 = vrot.slane %v399, 6
      %v437 = vrot.slane %v405, 5
      %v440 = vrot.slane %v411, 4
      %v443 = vrot.slane %v417, 3
      %v446 = vrot.slane %v423, 2
      %v449 = vrot.slane %v429, 1
      %v451 = vsel %vm184, %v387, %v431
      %v452 = vsel %vm186, %v451, %v434
      %v453 = vsel %vm188, %v452, %v437
      %v454 = vsel %vm190, %v453, %v440
      %v455 = vsel %vm192, %v454, %v443
      %v456 = vsel %vm194, %v455, %v446
      %v457 = vsel %vm196, %v456, %v449
      %459 = vrot.lane.b32.xlu0 %v305, 32
      %v460 = vpop.permute.xlu0 %459
      %463 = vrot.lane.b32.xlu0 %v381, 64
      %v464 = vpop.permute.xlu0 %463
      %467 = vrot.lane.b32.xlu0 %v457, 96
      %v468 = vpop.permute.xlu0 %467
      %vm470 = vcmask 261120
      %v471 = vsel %vm470, %v197, %v460
      %vm472 = vcmask 523264
      %v473 = vsel %vm472, %v471, %v464
      %vm474 = vcmask 785408
      %v475 = vsel %vm474, %v473, %v468
      %476 = vst [vmem:[%s130] sm:$0xff] %v475
      %p477 = scmp.lt.s32.totalorder %s22, 1
      %s478 = scalar_select %p477, %s22, 1
      %s479 = smul.addr %s478, 8
      %s480 = scalar_lea.vmem %s3, %s479
      // Predicated region
      $region29: #{setrank_forward.1} parent=27 // pred_check
        %p481 = pneg %p82
      $region30: #{setrank_forward.1} parent=27 // pred_check_branch
        %483 = sbr.rel (%p481) target = $region32
      $region31: #{setrank_forward.1} parent=27 // pred_region
        _
      $region32: #{setrank_forward.1} parent=27 // pred_fallthru
        _
    $region28: #{setrank_forward.1} parent=5 // pred_fallthru
      _
    %p484 = scmp.le.s32.totalorder 2, %s17
    // Predicated region
    $region33: #{setrank_forward.1} parent=5 // pred_check
      %p485 = pneg %p484
    $region34: #{setrank_forward.1} parent=5 // pred_check_branch
      %487 = sbr.rel (%p485) target = $region36
    $region35: #{setrank_forward.1} parent=5 // pred_region
      %s488 = ssub.s32 %s17, 2
      // Predicated region
      $region37: #{setrank_forward.1} parent=35 // pred_check
        %p489 = pneg %p88
      $region38: #{setrank_forward.1} parent=35 // pred_check_branch
        %491 = sbr.rel (%p489) target = $region40
      $region39: #{setrank_forward.1} parent=35 // pred_region
        %p492 = scmp.lt.s32.totalorder %s23, 1
        %s493 = scalar_select %p492, %s23, 1
        %s494 = smul.addr %s493, 8
        %s495 = scalar_lea.vmem %s3, %s494
      $region40: #{setrank_forward.1} parent=35 // pred_fallthru
        _
    $region36: #{setrank_forward.1} parent=5 // pred_fallthru
      _
  $region6: #{setrank_forward.1} parent=0 // loop_footer
    %s21 = sadd.s32 1, %s17
  $region7: #{setrank_forward.1} parent=0 // loop_footer_branch
    %16 = sbr.rel target = $region3
  $region8: #{setrank_forward.1} parent=0 // loop_exit
    _

</llo_original>
